<compile_context>
chip_gen: v6e
topology: v6e:2x2x1
jax: 0.10.0
libtpu: 0.0.40
codegen_flags: <defaults>
</compile_context>

<pallas_src>
import jax
import jax.numpy as jnp
from jax.experimental import pallas as pl
from jax.experimental.pallas import tpu as pltpu

LANE = 128


def _round_up(v, m):
    return ((v + m - 1) // m) * m


def _pad2d(a, rows, cols):
    return jnp.pad(a, ((0, rows - a.shape[0]), (0, cols - a.shape[1])))


# ----------------------------------------------------------------------------
# Pallas kernel: fused 2-layer SAGEConv forward (single VMEM-resident block)
# ----------------------------------------------------------------------------
def _gnn_fused_kernel(x_ref, a_ref, wl1_ref, wr1_ref, b1_ref,
                      wl2_ref, wr2_ref, b2_ref, o_ref):
    x = x_ref[...]                                                     # (Np, Fin_p) bf16
    a = a_ref[...]                                                     # (Np, Np)    bf16

    # ---- layer 1: h = relu(A@x @ Wl1 + x @ Wr1 + b1) ----------------------
    agg = jnp.dot(a, x, preferred_element_type=jnp.float32)            # f32 accumulate
    agg = agg.astype(jnp.bfloat16)
    h = (jnp.dot(agg, wl1_ref[...], preferred_element_type=jnp.float32)
         + jnp.dot(x, wr1_ref[...], preferred_element_type=jnp.float32)
         + b1_ref[...])
    h = jnp.maximum(h, 0.0).astype(jnp.bfloat16)                       # (Np, H_p)

    # ---- layer 2: y = A @ (h @ Wl2) + h @ Wr2 + b2 ------------------------
    # (reassociated; after lane padding H_p == Fout_p so MXU cost is identical
    #  either way — kept only because it keeps the accumulation in Fout lanes)
    hl = jnp.dot(h, wl2_ref[...], preferred_element_type=jnp.float32)
    hl = hl.astype(jnp.bfloat16)
    hr = jnp.dot(h, wr2_ref[...], preferred_element_type=jnp.float32)
    y = jnp.dot(a, hl, preferred_element_type=jnp.float32) + hr + b2_ref[...]
    o_ref[...] = y.astype(o_ref.dtype)


# ----------------------------------------------------------------------------
# Glue: edge_index -> dense row-normalized mean-aggregation matrix (scatter-add)
# ----------------------------------------------------------------------------
def build_mean_aggr_matrix(edge_index, num_nodes):
    src, dst = edge_index[0], edge_index[1]
    counts = jnp.zeros((num_nodes, num_nodes), jnp.float32).at[dst, src].add(1.0)
    deg = counts.sum(axis=1, keepdims=True)
    return counts / jnp.maximum(deg, 1.0)          # isolated nodes aggregate to 0


def gnn_forward(x, edge_index, params):
    """GNN.forward: relu(SAGE1(x, E)) -> SAGE2(., E), fused in one pallas_call."""
    n, f_in = x.shape
    hidden = params["wl1"].shape[1]
    out_dim = params["wl2"].shape[1]

    n_p = _round_up(n, LANE)                       # lane-pad N: A is (Np, Np), Np % 128 == 0
    f_in_p = _round_up(f_in, LANE)
    h_p = _round_up(hidden, LANE)
    f_out_p = _round_up(out_dim, LANE)

    a = build_mean_aggr_matrix(edge_index, n)
    a_p = _pad2d(a, n_p, n_p).astype(jnp.bfloat16)
    x_p = _pad2d(x.astype(jnp.float32), n_p, f_in_p).astype(jnp.bfloat16)

    wl1 = _pad2d(params["wl1"], f_in_p, h_p).astype(jnp.bfloat16)
    wr1 = _pad2d(params["wr1"], f_in_p, h_p).astype(jnp.bfloat16)
    b1 = _pad2d(params["b1"], 1, h_p)              # f32
    wl2 = _pad2d(params["wl2"], h_p, f_out_p).astype(jnp.bfloat16)
    wr2 = _pad2d(params["wr2"], h_p, f_out_p).astype(jnp.bfloat16)
    b2 = _pad2d(params["b2"], 1, f_out_p)          # f32

    vmem_spec = pl.BlockSpec(memory_space=pltpu.MemorySpace.VMEM)
    out_p = pl.pallas_call(
        _gnn_fused_kernel,
        out_shape=jax.ShapeDtypeStruct((n_p, f_out_p), jnp.float32),
        in_specs=[vmem_spec] * 8,
        out_specs=vmem_spec,
        compiler_params=pltpu.CompilerParams(vmem_limit_bytes=64 * 1024 * 1024),
    )(x_p, a_p, wl1, wr1, b1, wl2, wr2, b2)
    return out_p[:n, :out_dim]


# ----------------------------------------------------------------------------
# References for correctness checks
# ----------------------------------------------------------------------------
def gnn_reference_f32(x, edge_index, params):
    a = build_mean_aggr_matrix(edge_index, x.shape[0])
    h = jnp.maximum((a @ x) @ params["wl1"] + x @ params["wr1"] + params["b1"], 0.0)
    return (a @ h) @ params["wl2"] + h @ params["wr2"] + params["b2"]


def gnn_reference_bf16(x, edge_index, params):
    """Mirrors the kernel's bf16-input / f32-accumulate arithmetic."""
    bf = jnp.bfloat16
    a = build_mean_aggr_matrix(edge_index, x.shape[0]).astype(bf)
    xb = x.astype(bf)
    agg = jnp.dot(a, xb, preferred_element_type=jnp.float32).astype(bf)
    h = (jnp.dot(agg, params["wl1"].astype(bf), preferred_element_type=jnp.float32)
         + jnp.dot(xb, params["wr1"].astype(bf), preferred_element_type=jnp.float32)
         + params["b1"])
    h = jnp.maximum(h, 0.0).astype(bf)
    hl = jnp.dot(h, params["wl2"].astype(bf), preferred_element_type=jnp.float32).astype(bf)
    hr = jnp.dot(h, params["wr2"].astype(bf), preferred_element_type=jnp.float32)
    return jnp.dot(a, hl, preferred_element_type=jnp.float32) + hr + params["b2"]


def init_params(key, in_dim, hidden, out_dim):
    ks = jax.random.split(key, 4)
    s1 = 1.0 / jnp.sqrt(jnp.float32(in_dim))
    s2 = 1.0 / jnp.sqrt(jnp.float32(hidden))
    return {
        "wl1": jax.random.uniform(ks[0], (in_dim, hidden), jnp.float32, -s1, s1),
        "wr1": jax.random.uniform(ks[1], (in_dim, hidden), jnp.float32, -s1, s1),
        "b1": jnp.zeros((1, hidden), jnp.float32),
        "wl2": jax.random.uniform(ks[2], (hidden, out_dim), jnp.float32, -s2, s2),
        "wr2": jax.random.uniform(ks[3], (hidden, out_dim), jnp.float32, -s2, s2),
        "b2": jnp.zeros((1, out_dim), jnp.float32),
    }


if __name__ == "__main__":
    key = jax.random.PRNGKey(0)
    k_edges, k_params = jax.random.split(key)

    num_nodes = 16          # num_doc; input features = identity(num_doc) as in the script
    hidden_channels = 32
    out_channels = 8
    num_edges = 48

    x = jnp.eye(num_nodes, dtype=jnp.float32)                 # x = np.identity(num_doc)
    edge_index = jax.random.randint(k_edges, (2, num_edges), 0, num_nodes)

    params = init_params(k_params, num_nodes, hidden_channels, out_channels)

    out = gnn_forward(x, edge_index, params)
    out = jax.block_until_ready(out)
    assert out.shape == (num_nodes, out_channels)

    # Tight check against a bf16-matched reference (validates the fusion itself).
    ref_bf16 = gnn_reference_bf16(x, edge_index, params)
    assert jnp.allclose(out, ref_bf16, atol=1e-3, rtol=1e-3), "mismatch vs bf16 reference"

    # Looser check against the full-f32 reference (bf16 MXU inputs, f32 accumulate).
    ref_f32 = gnn_reference_f32(x, edge_index, params)
    assert jnp.allclose(out, ref_f32, atol=3e-2, rtol=3e-2), "mismatch vs f32 reference"

    print("KERNEL_OK")
</pallas_src>

<mosaic_0001>
module attributes {stable_mosaic.version = 11 : i64} {
  func.func @_gnn_fused_kernel(%arg0: memref<128x128xbf16, #tpu.memory_space<vmem>>, %arg1: memref<128x128xbf16, #tpu.memory_space<vmem>>, %arg2: memref<128x128xbf16, #tpu.memory_space<vmem>>, %arg3: memref<128x128xbf16, #tpu.memory_space<vmem>>, %arg4: memref<1x128xf32, #tpu.memory_space<vmem>>, %arg5: memref<128x128xbf16, #tpu.memory_space<vmem>>, %arg6: memref<128x128xbf16, #tpu.memory_space<vmem>>, %arg7: memref<1x128xf32, #tpu.memory_space<vmem>>, %arg8: memref<128x128xf32, #tpu.memory_space<vmem>>) attributes {dimension_semantics = [], scalar_prefetch = 0 : i64, scratch_operands = 0 : i64, tpu.core_type = #tpu.core_type<tc>} {
    %c0 = arith.constant 0 : index
    %c0_0 = arith.constant 0 : index
    %0 = vector.load %arg0[%c0, %c0_0] : memref<128x128xbf16, #tpu.memory_space<vmem>>, vector<128x128xbf16>
    %c0_1 = arith.constant 0 : index
    %c0_2 = arith.constant 0 : index
    %1 = vector.load %arg1[%c0_1, %c0_2] : memref<128x128xbf16, #tpu.memory_space<vmem>>, vector<128x128xbf16>
    %cst = arith.constant dense<0.000000e+00> : vector<128x128xf32>
    %2 = tpu.matmul %1, %0, %cst {dimension_numbers = #tpu.dot_dimension_numbers<[1], [0], [0], [1], [0, 0, 1, 1], [], []>} : vector<128x128xbf16>, vector<128x128xbf16>, vector<128x128xf32> -> vector<128x128xf32>
    %3 = arith.truncf %2 : vector<128x128xf32> to vector<128x128xbf16>
    %c0_3 = arith.constant 0 : index
    %c0_4 = arith.constant 0 : index
    %4 = vector.load %arg2[%c0_3, %c0_4] : memref<128x128xbf16, #tpu.memory_space<vmem>>, vector<128x128xbf16>
    %cst_5 = arith.constant dense<0.000000e+00> : vector<128x128xf32>
    %5 = tpu.matmul %3, %4, %cst_5 {dimension_numbers = #tpu.dot_dimension_numbers<[1], [0], [0], [1], [0, 0, 1, 1], [], []>} : vector<128x128xbf16>, vector<128x128xbf16>, vector<128x128xf32> -> vector<128x128xf32>
    %c0_6 = arith.constant 0 : index
    %c0_7 = arith.constant 0 : index
    %6 = vector.load %arg3[%c0_6, %c0_7] : memref<128x128xbf16, #tpu.memory_space<vmem>>, vector<128x128xbf16>
    %cst_8 = arith.constant dense<0.000000e+00> : vector<128x128xf32>
    %7 = tpu.matmul %0, %6, %cst_8 {dimension_numbers = #tpu.dot_dimension_numbers<[1], [0], [0], [1], [0, 0, 1, 1], [], []>} : vector<128x128xbf16>, vector<128x128xbf16>, vector<128x128xf32> -> vector<128x128xf32>
    %8 = arith.addf %5, %7 : vector<128x128xf32>
    %c0_9 = arith.constant 0 : index
    %c0_10 = arith.constant 0 : index
    %9 = vector.load %arg4[%c0_9, %c0_10] : memref<1x128xf32, #tpu.memory_space<vmem>>, vector<1x128xf32>
    %10 = vector.broadcast %9 : vector<1x128xf32> to vector<128x128xf32>
    %11 = arith.addf %8, %10 : vector<128x128xf32>
    %cst_11 = arith.constant 0.000000e+00 : f32
    %12 = vector.broadcast %cst_11 : f32 to vector<128x128xf32>
    %13 = arith.maximumf %11, %12 : vector<128x128xf32>
    %14 = arith.truncf %13 : vector<128x128xf32> to vector<128x128xbf16>
    %c0_12 = arith.constant 0 : index
    %c0_13 = arith.constant 0 : index
    %15 = vector.load %arg5[%c0_12, %c0_13] : memref<128x128xbf16, #tpu.memory_space<vmem>>, vector<128x128xbf16>
    %cst_14 = arith.constant dense<0.000000e+00> : vector<128x128xf32>
    %16 = tpu.matmul %14, %15, %cst_14 {dimension_numbers = #tpu.dot_dimension_numbers<[1], [0], [0], [1], [0, 0, 1, 1], [], []>} : vector<128x128xbf16>, vector<128x128xbf16>, vector<128x128xf32> -> vector<128x128xf32>
    %17 = arith.truncf %16 : vector<128x128xf32> to vector<128x128xbf16>
    %c0_15 = arith.constant 0 : index
    %c0_16 = arith.constant 0 : index
    %18 = vector.load %arg6[%c0_15, %c0_16] : memref<128x128xbf16, #tpu.memory_space<vmem>>, vector<128x128xbf16>
    %cst_17 = arith.constant dense<0.000000e+00> : vector<128x128xf32>
    %19 = tpu.matmul %14, %18, %cst_17 {dimension_numbers = #tpu.dot_dimension_numbers<[1], [0], [0], [1], [0, 0, 1, 1], [], []>} : vector<128x128xbf16>, vector<128x128xbf16>, vector<128x128xf32> -> vector<128x128xf32>
    %cst_18 = arith.constant dense<0.000000e+00> : vector<128x128xf32>
    %20 = tpu.matmul %1, %17, %cst_18 {dimension_numbers = #tpu.dot_dimension_numbers<[1], [0], [0], [1], [0, 0, 1, 1], [], []>} : vector<128x128xbf16>, vector<128x128xbf16>, vector<128x128xf32> -> vector<128x128xf32>
    %21 = arith.addf %20, %19 : vector<128x128xf32>
    %c0_19 = arith.constant 0 : index
    %c0_20 = arith.constant 0 : index
    %22 = vector.load %arg7[%c0_19, %c0_20] : memref<1x128xf32, #tpu.memory_space<vmem>>, vector<1x128xf32>
    %23 = vector.broadcast %22 : vector<1x128xf32> to vector<128x128xf32>
    %24 = arith.addf %21, %23 : vector<128x128xf32>
    %c0_21 = arith.constant 0 : index
    %c0_22 = arith.constant 0 : index
    %25 = vector.load %arg8[%c0_21, %c0_22] : memref<128x128xf32, #tpu.memory_space<vmem>>, vector<128x128xf32>
    tpu.vector_store %arg8[%c0_21, %c0_22], %24 {strides = array<i32>} : memref<128x128xf32, #tpu.memory_space<vmem>>, vector<128x128xf32>,
    return
  }
}

</mosaic_0001>

<llo_original>
// kernel: tpu_custom_call.1
$region0: #{tpu_custom_call.1}
  #allocation0 [shape = 'u32[]', space=smem, size = 0x4, offset = 0x4, fixed_abs, tag = 'smem constant byte address 0x4 - core index']
  #allocation1 [shape = 'u32[144,128]{1,0:T(1,128)}', space=vmem, size = 0x12000, scoped, tag = 'internal scratch']
  %s0 = inlined_call_operand.hbm [shape: bf16[128,128], index: 0, kind: input, shape index: {}]
  %s1 = inlined_call_operand.hbm [shape: bf16[128,128], index: 1, kind: input, shape index: {}]
  %s2 = inlined_call_operand.hbm [shape: bf16[128,128], index: 2, kind: input, shape index: {}]
  %s3 = inlined_call_operand.hbm [shape: bf16[128,128], index: 3, kind: input, shape index: {}]
  %s4 = inlined_call_operand.vmem [shape: f32[1,128], index: 4, kind: input, shape index: {}]
  %s5 = inlined_call_operand.hbm [shape: bf16[128,128], index: 5, kind: input, shape index: {}]
  %s6 = inlined_call_operand.hbm [shape: bf16[128,128], index: 6, kind: input, shape index: {}]
  %s7 = inlined_call_operand.vmem [shape: f32[1,128], index: 7, kind: input, shape index: {}]
  %s8 = inlined_call_operand.hbm [shape: f32[128,128], index: 8, kind: output, shape index: {}]
  %s9 = sld [smem:[#allocation0]]
  $region66: #{tpu_custom_call.1} parent=0
    _
  %s11 = ssub.s32 1, %s9
  %s12 = scalar_select 0, %s11, %s9
  $region1: #{tpu_custom_call.1} parent=0
    #allocation2 [shape = 'u8[32768]{0}', space=vmem, size = 0x8000, scoped, tag = 'input window, operand 0, single buffered']
    #allocation3 [shape = 's32[1]{0}', space=sflag, size = 0x4, scoped, tag = 'scoped memory for tpu_custom_call.1']
    #allocation4 [shape = 's32[1]{0}', space=sflag, size = 0x4, scoped, tag = 'scoped memory for tpu_custom_call.1']
    #allocation5 [shape = 'u8[32768]{0}', space=vmem, size = 0x8000, scoped, tag = 'input window, operand 1, single buffered']
    #allocation6 [shape = 's32[1]{0}', space=sflag, size = 0x4, scoped, tag = 'scoped memory for tpu_custom_call.1']
    #allocation7 [shape = 'u8[32768]{0}', space=vmem, size = 0x8000, scoped, tag = 'input window, operand 2, single buffered']
    #allocation8 [shape = 'u8[32768]{0}', space=vmem, size = 0x8000, scoped, tag = 'input window, operand 3, single buffered']
    #allocation9 [shape = 's32[1]{0}', space=sflag, size = 0x4, scoped, tag = 'scoped memory for tpu_custom_call.1']
    #allocation10 [shape = 'u8[32768]{0}', space=vmem, size = 0x8000, scoped, tag = 'input window, operand 5, single buffered']
    #allocation11 [shape = 'u8[32768]{0}', space=vmem, size = 0x8000, scoped, tag = 'input window, operand 6, single buffered']
    #allocation12 [shape = 's32[1]{0}', space=sflag, size = 0x4, scoped, tag = 'scoped memory for tpu_custom_call.1']
    #allocation13 [shape = 'u8[65536]{0}', space=vmem, size = 0x10000, scoped, tag = 'output window, operand 0, single buffered']
    %13 = vsyncpa [#allocation3], 0
    %14 = vsyncpa [#allocation6], 0
    %15 = vsyncpa [#allocation9], 0
    %16 = vsyncpa [#allocation12], 0
    %17 = vsyncpa [#allocation4], 0
    // Predicated region
    $region2: #{tpu_custom_call.1} parent=1 // pred_check
      _
    $region3: #{tpu_custom_call.1} parent=1 // pred_check_branch
      %19 = sbr.rel (0) target = $region5
    $region4: #{tpu_custom_call.1} parent=1 // pred_region
      %s21 = ssub.s32 1024, 1024
      %22 = vsyncadd [#allocation3], %s21
      %s23 = sshll.u32 [#allocation2], 4
      %s24 = int_to_ptr.vmem [resolvable:$true] %s23
      %29 = dma.hbm_to_vmem [thread:$0]  %s0, 1024, %s24, [#allocation3], 64, 64, 4
    $region5: #{tpu_custom_call.1} parent=1 // pred_fallthru
      _
    // Predicated region
    $region6: #{tpu_custom_call.1} parent=1 // pred_check
      _
    $region7: #{tpu_custom_call.1} parent=1 // pred_check_branch
      %31 = sbr.rel (0) target = $region9
    $region8: #{tpu_custom_call.1} parent=1 // pred_region
      %s33 = ssub.s32 1024, 1024
      %34 = vsyncadd [#allocation6], %s33
      %s35 = sshll.u32 [#allocation5], 4
      %s36 = int_to_ptr.vmem [resolvable:$true] %s35
      %41 = dma.hbm_to_vmem [thread:$0]  %s1, 1024, %s36, [#allocation6], 64, 64, 4
    $region9: #{tpu_custom_call.1} parent=1 // pred_fallthru
      _
    // Predicated region
    $region10: #{tpu_custom_call.1} parent=1 // pred_check
      _
    $region11: #{tpu_custom_call.1} parent=1 // pred_check_branch
      %43 = sbr.rel (0) target = $region13
    $region12: #{tpu_custom_call.1} parent=1 // pred_region
      %s45 = ssub.s32 1024, 1024
      %46 = vsyncadd [#allocation6], %s45
      %s47 = sshll.u32 [#allocation7], 4
      %s48 = int_to_ptr.vmem [resolvable:$true] %s47
      %53 = dma.hbm_to_vmem [thread:$0]  %s2, 1024, %s48, [#allocation6], 64, 64, 4
    $region13: #{tpu_custom_call.1} parent=1 // pred_fallthru
      _
    // Predicated region
    $region14: #{tpu_custom_call.1} parent=1 // pred_check
      _
    $region15: #{tpu_custom_call.1} parent=1 // pred_check_branch
      %55 = sbr.rel (0) target = $region17
    $region16: #{tpu_custom_call.1} parent=1 // pred_region
      %s57 = ssub.s32 1024, 1024
      %58 = vsyncadd [#allocation9], %s57
      %s59 = sshll.u32 [#allocation8], 4
      %s60 = int_to_ptr.vmem [resolvable:$true] %s59
      %65 = dma.hbm_to_vmem [thread:$0]  %s3, 1024, %s60, [#allocation9], 64, 64, 4
    $region17: #{tpu_custom_call.1} parent=1 // pred_fallthru
      _
    // Predicated region
    $region18: #{tpu_custom_call.1} parent=1 // pred_check
      _
    $region19: #{tpu_custom_call.1} parent=1 // pred_check_branch
      %67 = sbr.rel (0) target = $region21
    $region20: #{tpu_custom_call.1} parent=1 // pred_region
      _
    $region21: #{tpu_custom_call.1} parent=1 // pred_fallthru
      _
    // Predicated region
    $region22: #{tpu_custom_call.1} parent=1 // pred_check
      _
    $region23: #{tpu_custom_call.1} parent=1 // pred_check_branch
      %69 = sbr.rel (0) target = $region25
    $region24: #{tpu_custom_call.1} parent=1 // pred_region
      %s71 = ssub.s32 1024, 1024
      %72 = vsyncadd [#allocation9], %s71
      %s73 = sshll.u32 [#allocation10], 4
      %s74 = int_to_ptr.vmem [resolvable:$true] %s73
      %79 = dma.hbm_to_vmem [thread:$0]  %s5, 1024, %s74, [#allocation9], 64, 64, 4
    $region25: #{tpu_custom_call.1} parent=1 // pred_fallthru
      _
    // Predicated region
    $region26: #{tpu_custom_call.1} parent=1 // pred_check
      _
    $region27: #{tpu_custom_call.1} parent=1 // pred_check_branch
      %81 = sbr.rel (0) target = $region29
    $region28: #{tpu_custom_call.1} parent=1 // pred_region
      %s83 = ssub.s32 1024, 1024
      %84 = vsyncadd [#allocation12], %s83
      %s85 = sshll.u32 [#allocation11], 4
      %s86 = int_to_ptr.vmem [resolvable:$true] %s85
      %91 = dma.hbm_to_vmem [thread:$0]  %s6, 1024, %s86, [#allocation12], 64, 64, 4
    $region29: #{tpu_custom_call.1} parent=1 // pred_fallthru
      _
    // Predicated region
    $region30: #{tpu_custom_call.1} parent=1 // pred_check
      _
    $region31: #{tpu_custom_call.1} parent=1 // pred_check_branch
      %93 = sbr.rel (0) target = $region33
    $region32: #{tpu_custom_call.1} parent=1 // pred_region
      _
    $region33: #{tpu_custom_call.1} parent=1 // pred_fallthru
      _
    // Predicated region
    $region34: #{tpu_custom_call.1} parent=1 // pred_check
      _
    $region35: #{tpu_custom_call.1} parent=1 // pred_check_branch
      %95 = sbr.rel (0) target = $region37
    $region36: #{tpu_custom_call.1} parent=1 // pred_region
      %96 = dma.done [#allocation3], 1024
    $region37: #{tpu_custom_call.1} parent=1 // pred_fallthru
      _
    // Predicated region
    $region38: #{tpu_custom_call.1} parent=1 // pred_check
      _
    $region39: #{tpu_custom_call.1} parent=1 // pred_check_branch
      %98 = sbr.rel (0) target = $region41
    $region40: #{tpu_custom_call.1} parent=1 // pred_region
      %99 = dma.done [#allocation6], 1024
    $region41: #{tpu_custom_call.1} parent=1 // pred_fallthru
      _
    // Predicated region
    $region42: #{tpu_custom_call.1} parent=1 // pred_check
      _
    $region43: #{tpu_custom_call.1} parent=1 // pred_check_branch
      %101 = sbr.rel (0) target = $region45
    $region44: #{tpu_custom_call.1} parent=1 // pred_region
      %102 = dma.done [#allocation6], 1024
    $region45: #{tpu_custom_call.1} parent=1 // pred_fallthru
      _
    // Predicated region
    $region46: #{tpu_custom_call.1} parent=1 // pred_check
      _
    $region47: #{tpu_custom_call.1} parent=1 // pred_check_branch
      %104 = sbr.rel (0) target = $region49
    $region48: #{tpu_custom_call.1} parent=1 // pred_region
      %105 = dma.done [#allocation9], 1024
    $region49: #{tpu_custom_call.1} parent=1 // pred_fallthru
      _
    // Predicated region
    $region50: #{tpu_custom_call.1} parent=1 // pred_check
      _
    $region51: #{tpu_custom_call.1} parent=1 // pred_check_branch
      %107 = sbr.rel (0) target = $region53
    $region52: #{tpu_custom_call.1} parent=1 // pred_region
      %108 = dma.done [#allocation9], 1024
    $region53: #{tpu_custom_call.1} parent=1 // pred_fallthru
      _
    // Predicated region
    $region54: #{tpu_custom_call.1} parent=1 // pred_check
      _
    $region55: #{tpu_custom_call.1} parent=1 // pred_check_branch
      %110 = sbr.rel (0) target = $region57
    $region56: #{tpu_custom_call.1} parent=1 // pred_region
      %111 = dma.done [#allocation12], 1024
    $region57: #{tpu_custom_call.1} parent=1 // pred_fallthru
      _
    %v113 = vld [vmem:[#allocation2] sm:$0xf]
    %v114 = vld [vmem:[#allocation2 + $0x4] sm:$0xf]
    %v115 = vld [vmem:[#allocation2 + $0x8] sm:$0xf]
    %v116 = vld [vmem:[#allocation2 + $0xc] sm:$0xf]
    %v117 = vld [vmem:[#allocation2 + $0x10] sm:$0xf]
    %v118 = vld [vmem:[#allocation2 + $0x14] sm:$0xf]
    %v119 = vld [vmem:[#allocation2 + $0x18] sm:$0xf]
    %v120 = vld [vmem:[#allocation2 + $0x1c] sm:$0xf]
    %v121 = vld [vmem:[#allocation2 + $0x20] sm:$0xf]
    %v122 = vld [vmem:[#allocation2 + $0x24] sm:$0xf]
    %v123 = vld [vmem:[#allocation2 + $0x28] sm:$0xf]
    %v124 = vld [vmem:[#allocation2 + $0x2c] sm:$0xf]
    %v125 = vld [vmem:[#allocation2 + $0x30] sm:$0xf]
    %v126 = vld [vmem:[#allocation2 + $0x34] sm:$0xf]
    %v127 = vld [vmem:[#allocation2 + $0x38] sm:$0xf]
    %v128 = vld [vmem:[#allocation2 + $0x3c] sm:$0xf]
    %v129 = vld [vmem:[#allocation5] sm:$0xf]
    %v130 = vld [vmem:[#allocation5 + $0x4] sm:$0xf]
    %v131 = vld [vmem:[#allocation5 + $0x8] sm:$0xf]
    %v132 = vld [vmem:[#allocation5 + $0xc] sm:$0xf]
    %v133 = vld [vmem:[#allocation5 + $0x10] sm:$0xf]
    %v134 = vld [vmem:[#allocation5 + $0x14] sm:$0xf]
    %v135 = vld [vmem:[#allocation5 + $0x18] sm:$0xf]
    %v136 = vld [vmem:[#allocation5 + $0x1c] sm:$0xf]
    %v137 = vld [vmem:[#allocation5 + $0x20] sm:$0xf]
    %v138 = vld [vmem:[#allocation5 + $0x24] sm:$0xf]
    %v139 = vld [vmem:[#allocation5 + $0x28] sm:$0xf]
    %v140 = vld [vmem:[#allocation5 + $0x2c] sm:$0xf]
    %v141 = vld [vmem:[#allocation5 + $0x30] sm:$0xf]
    %v142 = vld [vmem:[#allocation5 + $0x34] sm:$0xf]
    %v143 = vld [vmem:[#allocation5 + $0x38] sm:$0xf]
    %v144 = vld [vmem:[#allocation5 + $0x3c] sm:$0xf]
    %v161 = vunpack.c.l.b16 %v129
    %v162 = vunpack.c.l.b16 %v130
    %v163 = vunpack.c.l.b16 %v131
    %v164 = vunpack.c.l.b16 %v132
    %v165 = vunpack.c.l.b16 %v133
    %v166 = vunpack.c.l.b16 %v134
    %v167 = vunpack.c.l.b16 %v135
    %v168 = vunpack.c.l.b16 %v136
    %v169 = vunpack.c.l.b16 %v137
    %v170 = vunpack.c.l.b16 %v138
    %v171 = vunpack.c.l.b16 %v139
    %v172 = vunpack.c.l.b16 %v140
    %v173 = vunpack.c.l.b16 %v141
    %v174 = vunpack.c.l.b16 %v142
    %v175 = vunpack.c.l.b16 %v143
    %v176 = vunpack.c.l.b16 %v144
    %v177 = vpack.c.b16 %v162, %v161
    %v178 = vpack.c.b16 %v164, %v163
    %v179 = vpack.c.b16 %v166, %v165
    %v180 = vpack.c.b16 %v168, %v167
    %v181 = vpack.c.b16 %v170, %v169
    %v182 = vpack.c.b16 %v172, %v171
    %v183 = vpack.c.b16 %v174, %v173
    %v184 = vpack.c.b16 %v176, %v175
    %v209 = vunpack.c.l.b16 %v113
    %v210 = vunpack.c.l.b16 %v114
    %v211 = vunpack.c.l.b16 %v115
    %v212 = vunpack.c.l.b16 %v116
    %v213 = vunpack.c.l.b16 %v117
    %v214 = vunpack.c.l.b16 %v118
    %v215 = vunpack.c.l.b16 %v119
    %v216 = vunpack.c.l.b16 %v120
    %v217 = vunpack.c.l.b16 %v121
    %v218 = vunpack.c.l.b16 %v122
    %v219 = vunpack.c.l.b16 %v123
    %v220 = vunpack.c.l.b16 %v124
    %v221 = vunpack.c.l.b16 %v125
    %v222 = vunpack.c.l.b16 %v126
    %v223 = vunpack.c.l.b16 %v127
    %v224 = vunpack.c.l.b16 %v128
    %v225 = vpack.c.b16 %v210, %v209
    %v226 = vpack.c.b16 %v212, %v211
    %v227 = vpack.c.b16 %v214, %v213
    %v228 = vpack.c.b16 %v216, %v215
    %v229 = vpack.c.b16 %v218, %v217
    %v230 = vpack.c.b16 %v220, %v219
    %v231 = vpack.c.b16 %v222, %v221
    %v232 = vpack.c.b16 %v224, %v223
    %241 = vmatprep.subr.bf16.mxu0 0
    %242 = vmatpush1.bf16.msra.mxu0 %v232
    %243 = vmatprep.subr.bf16.mxu0 0
    %244 = vmatpush1.bf16.msra.mxu0 %v231
    %245 = vmatprep.subr.bf16.mxu0 0
    %246 = vmatpush1.bf16.msra.mxu0 %v230
    %247 = vmatprep.subr.bf16.mxu0 0
    %248 = vmatpush1.bf16.msra.mxu0 %v229
    %249 = vmatprep.subr.bf16.mxu0 0
    %250 = vmatpush1.bf16.msra.mxu0 %v228
    %251 = vmatprep.subr.bf16.mxu0 0
    %252 = vmatpush1.bf16.msra.mxu0 %v227
    %253 = vmatprep.subr.bf16.mxu0 0
    %254 = vmatpush1.bf16.msra.mxu0 %v226
    %255 = vmatprep.subr.bf16.mxu0 0
    %256 = vmatpush1.bf16.msra.mxu0 %v225
    %257 = vmatprep.subr.bf16.mxu0 0
    %258 = vmatpush2.bf16.msra.mxu0 0
    %259 = vmatprep.subr.bf16.mxu0 0
    %260 = vmatpush2.bf16.msra.mxu0 0
    %261 = vmatprep.subr.bf16.mxu0 0
    %262 = vmatpush2.bf16.msra.mxu0 0
    %263 = vmatprep.subr.bf16.mxu0 0
    %264 = vmatpush2.bf16.msra.mxu0 0
    %265 = vmatprep.subr.bf16.mxu0 0
    %266 = vmatpush2.bf16.msra.mxu0 0
    %267 = vmatprep.subr.bf16.mxu0 0
    %268 = vmatpush2.bf16.msra.mxu0 0
    %269 = vmatprep.subr.bf16.mxu0 0
    %270 = vmatpush2.bf16.msra.mxu0 0
    %271 = vmatprep.subr.bf16.mxu0 0
    %272 = vmatpush2.bf16.msra.mxu0 0
    %273 = vmatprep.mubr.bf16.mxu0 0
    %274 = vmatmul.mubr.bf16.gmra.mxu0 %v177
    %v275 = vpop.f32.mrf.mxu0
    %v276 = vadd.f32 0.0, %v275
    %v277 = vpop.f32.mrf.mxu0
    %v278 = vpop.f32.mrf.mxu0
    %v279 = vadd.f32 0.0, %v278
    %v280 = vpop.f32.mrf.mxu0
    %281 = vmatprep.mubr.bf16.mxu0 0
    %282 = vmatmul.mubr.bf16.gmra.mxu0 %v178
    %v283 = vpop.f32.mrf.mxu0
    %v284 = vadd.f32 0.0, %v283
    %v285 = vpop.f32.mrf.mxu0
    %v286 = vpop.f32.mrf.mxu0
    %v287 = vadd.f32 0.0, %v286
    %v288 = vpop.f32.mrf.mxu0
    %289 = vmatprep.mubr.bf16.mxu0 0
    %290 = vmatmul.mubr.bf16.gmra.mxu0 %v179
    %v291 = vpop.f32.mrf.mxu0
    %v292 = vadd.f32 0.0, %v291
    %v293 = vpop.f32.mrf.mxu0
    %v294 = vpop.f32.mrf.mxu0
    %v295 = vadd.f32 0.0, %v294
    %v296 = vpop.f32.mrf.mxu0
    %297 = vmatprep.mubr.bf16.mxu0 0
    %298 = vmatmul.mubr.bf16.gmra.mxu0 %v180
    %v299 = vpop.f32.mrf.mxu0
    %v300 = vadd.f32 0.0, %v299
    %v301 = vpop.f32.mrf.mxu0
    %v302 = vpop.f32.mrf.mxu0
    %v303 = vadd.f32 0.0, %v302
    %v304 = vpop.f32.mrf.mxu0
    %305 = vmatprep.mubr.bf16.mxu0 0
    %306 = vmatmul.mubr.bf16.gmra.mxu0 %v181
    %v307 = vpop.f32.mrf.mxu0
    %v308 = vadd.f32 0.0, %v307
    %v309 = vpop.f32.mrf.mxu0
    %v310 = vpop.f32.mrf.mxu0
    %v311 = vadd.f32 0.0, %v310
    %v312 = vpop.f32.mrf.mxu0
    %313 = vmatprep.mubr.bf16.mxu0 0
    %314 = vmatmul.mubr.bf16.gmra.mxu0 %v182
    %v315 = vpop.f32.mrf.mxu0
    %v316 = vadd.f32 0.0, %v315
    %v317 = vpop.f32.mrf.mxu0
    %v318 = vpop.f32.mrf.mxu0
    %v319 = vadd.f32 0.0, %v318
    %v320 = vpop.f32.mrf.mxu0
    %321 = vmatprep.mubr.bf16.mxu0 0
    %322 = vmatmul.mubr.bf16.gmra.mxu0 %v183
    %v323 = vpop.f32.mrf.mxu0
    %v324 = vadd.f32 0.0, %v323
    %v325 = vpop.f32.mrf.mxu0
    %v326 = vpop.f32.mrf.mxu0
    %v327 = vadd.f32 0.0, %v326
    %v328 = vpop.f32.mrf.mxu0
    %329 = vmatprep.mubr.bf16.mxu0 0
    %330 = vmatmul.mubr.bf16.gmra.mxu0 %v184
    %v331 = vpop.f32.mrf.mxu0
    %v332 = vadd.f32 0.0, %v331
    %v333 = vpop.f32.mrf.mxu0
    %v334 = vpop.f32.mrf.mxu0
    %v335 = vadd.f32 0.0, %v334
    %v336 = vpop.f32.mrf.mxu0
    %337 = vdwg.mxu0
    %v338 = vpack.c.bf16 %v279, %v276
    %v339 = vpack.c.bf16 %v287, %v284
    %v340 = vpack.c.bf16 %v295, %v292
    %v341 = vpack.c.bf16 %v303, %v300
    %v342 = vpack.c.bf16 %v311, %v308
    %v343 = vpack.c.bf16 %v319, %v316
    %v344 = vpack.c.bf16 %v327, %v324
    %v345 = vpack.c.bf16 %v335, %v332
    %v346 = vld [vmem:[#allocation7] sm:$0xf]
    %v347 = vld [vmem:[#allocation7 + $0x4] sm:$0xf]
    %v348 = vld [vmem:[#allocation7 + $0x8] sm:$0xf]
    %v349 = vld [vmem:[#allocation7 + $0xc] sm:$0xf]
    %v350 = vld [vmem:[#allocation7 + $0x10] sm:$0xf]
    %v351 = vld [vmem:[#allocation7 + $0x14] sm:$0xf]
    %v352 = vld [vmem:[#allocation7 + $0x18] sm:$0xf]
    %v353 = vld [vmem:[#allocation7 + $0x1c] sm:$0xf]
    %v354 = vld [vmem:[#allocation7 + $0x20] sm:$0xf]
    %v355 = vld [vmem:[#allocation7 + $0x24] sm:$0xf]
    %v356 = vld [vmem:[#allocation7 + $0x28] sm:$0xf]
    %v357 = vld [vmem:[#allocation7 + $0x2c] sm:$0xf]
    %v358 = vld [vmem:[#allocation7 + $0x30] sm:$0xf]
    %v359 = vld [vmem:[#allocation7 + $0x34] sm:$0xf]
    %v360 = vld [vmem:[#allocation7 + $0x38] sm:$0xf]
    %v361 = vld [vmem:[#allocation7 + $0x3c] sm:$0xf]
    %v362 = vld [vmem:[#allocation8] sm:$0xf]
    %v363 = vld [vmem:[#allocation8 + $0x4] sm:$0xf]
    %v364 = vld [vmem:[#allocation8 + $0x8] sm:$0xf]
    %v365 = vld [vmem:[#allocation8 + $0xc] sm:$0xf]
    %v366 = vld [vmem:[#allocation8 + $0x10] sm:$0xf]
    %v367 = vld [vmem:[#allocation8 + $0x14] sm:$0xf]
    %v368 = vld [vmem:[#allocation8 + $0x18] sm:$0xf]
    %v369 = vld [vmem:[#allocation8 + $0x1c] sm:$0xf]
    %v370 = vld [vmem:[#allocation8 + $0x20] sm:$0xf]
    %v371 = vld [vmem:[#allocation8 + $0x24] sm:$0xf]
    %v372 = vld [vmem:[#allocation8 + $0x28] sm:$0xf]
    %v373 = vld [vmem:[#allocation8 + $0x2c] sm:$0xf]
    %v374 = vld [vmem:[#allocation8 + $0x30] sm:$0xf]
    %v375 = vld [vmem:[#allocation8 + $0x34] sm:$0xf]
    %v376 = vld [vmem:[#allocation8 + $0x38] sm:$0xf]
    %v377 = vld [vmem:[#allocation8 + $0x3c] sm:$0xf]
    %v394 = vunpack.c.l.b16 %v362
    %v395 = vunpack.c.l.b16 %v363
    %v396 = vunpack.c.l.b16 %v364
    %v397 = vunpack.c.l.b16 %v365
    %v398 = vunpack.c.l.b16 %v366
    %v399 = vunpack.c.l.b16 %v367
    %v400 = vunpack.c.l.b16 %v368
    %v401 = vunpack.c.l.b16 %v369
    %v402 = vunpack.c.l.b16 %v370
    %v403 = vunpack.c.l.b16 %v371
    %v404 = vunpack.c.l.b16 %v372
    %v405 = vunpack.c.l.b16 %v373
    %v406 = vunpack.c.l.b16 %v374
    %v407 = vunpack.c.l.b16 %v375
    %v408 = vunpack.c.l.b16 %v376
    %v409 = vunpack.c.l.b16 %v377
    %v410 = vpack.c.b16 %v395, %v394
    %v411 = vpack.c.b16 %v397, %v396
    %v412 = vpack.c.b16 %v399, %v398
    %v413 = vpack.c.b16 %v401, %v400
    %v414 = vpack.c.b16 %v403, %v402
    %v415 = vpack.c.b16 %v405, %v404
    %v416 = vpack.c.b16 %v407, %v406
    %v417 = vpack.c.b16 %v409, %v408
    %426 = vmatprep.subr.bf16.mxu0 0
    %427 = vmatpush1.bf16.msra.mxu0 %v417
    %428 = vmatprep.subr.bf16.mxu0 0
    %429 = vmatpush1.bf16.msra.mxu0 %v416
    %430 = vmatprep.subr.bf16.mxu0 0
    %431 = vmatpush1.bf16.msra.mxu0 %v415
    %432 = vmatprep.subr.bf16.mxu0 0
    %433 = vmatpush1.bf16.msra.mxu0 %v414
    %434 = vmatprep.subr.bf16.mxu0 0
    %435 = vmatpush1.bf16.msra.mxu0 %v413
    %436 = vmatprep.subr.bf16.mxu0 0
    %437 = vmatpush1.bf16.msra.mxu0 %v412
    %438 = vmatprep.subr.bf16.mxu0 0
    %439 = vmatpush1.bf16.msra.mxu0 %v411
    %440 = vmatprep.subr.bf16.mxu0 0
    %441 = vmatpush1.bf16.msra.mxu0 %v410
    %442 = vmatprep.subr.bf16.mxu0 0
    %443 = vmatpush2.bf16.msra.mxu0 0
    %444 = vmatprep.subr.bf16.mxu0 0
    %445 = vmatpush2.bf16.msra.mxu0 0
    %446 = vmatprep.subr.bf16.mxu0 0
    %447 = vmatpush2.bf16.msra.mxu0 0
    %448 = vmatprep.subr.bf16.mxu0 0
    %449 = vmatpush2.bf16.msra.mxu0 0
    %450 = vmatprep.subr.bf16.mxu0 0
    %451 = vmatpush2.bf16.msra.mxu0 0
    %452 = vmatprep.subr.bf16.mxu0 0
    %453 = vmatpush2.bf16.msra.mxu0 0
    %454 = vmatprep.subr.bf16.mxu0 0
    %455 = vmatpush2.bf16.msra.mxu0 0
    %456 = vmatprep.subr.bf16.mxu0 0
    %457 = vmatpush2.bf16.msra.mxu0 0
    %458 = vmatprep.mubr.bf16.mxu0 0
    %459 = vmatmul.mubr.bf16.gmra.mxu0 %v225
    %v460 = vpop.f32.mrf.mxu0
    %v461 = vadd.f32 0.0, %v460
    %v462 = vpop.f32.mrf.mxu0
    %v463 = vpop.f32.mrf.mxu0
    %v464 = vadd.f32 0.0, %v463
    %v465 = vpop.f32.mrf.mxu0
    %466 = vmatprep.mubr.bf16.mxu0 0
    %467 = vmatmul.mubr.bf16.gmra.mxu0 %v226
    %v468 = vpop.f32.mrf.mxu0
    %v469 = vadd.f32 0.0, %v468
    %v470 = vpop.f32.mrf.mxu0
    %v471 = vpop.f32.mrf.mxu0
    %v472 = vadd.f32 0.0, %v471
    %v473 = vpop.f32.mrf.mxu0
    %474 = vmatprep.mubr.bf16.mxu0 0
    %475 = vmatmul.mubr.bf16.gmra.mxu0 %v227
    %v476 = vpop.f32.mrf.mxu0
    %v477 = vadd.f32 0.0, %v476
    %v478 = vpop.f32.mrf.mxu0
    %v479 = vpop.f32.mrf.mxu0
    %v480 = vadd.f32 0.0, %v479
    %v481 = vpop.f32.mrf.mxu0
    %482 = vmatprep.mubr.bf16.mxu0 0
    %483 = vmatmul.mubr.bf16.gmra.mxu0 %v228
    %v484 = vpop.f32.mrf.mxu0
    %v485 = vadd.f32 0.0, %v484
    %v486 = vpop.f32.mrf.mxu0
    %v487 = vpop.f32.mrf.mxu0
    %v488 = vadd.f32 0.0, %v487
    %v489 = vpop.f32.mrf.mxu0
    %490 = vmatprep.mubr.bf16.mxu0 0
    %491 = vmatmul.mubr.bf16.gmra.mxu0 %v229
    %v492 = vpop.f32.mrf.mxu0
    %v493 = vadd.f32 0.0, %v492
    %v494 = vpop.f32.mrf.mxu0
    %v495 = vpop.f32.mrf.mxu0
    %v496 = vadd.f32 0.0, %v495
    %v497 = vpop.f32.mrf.mxu0
    %498 = vmatprep.mubr.bf16.mxu0 0
    %499 = vmatmul.mubr.bf16.gmra.mxu0 %v230
    %v500 = vpop.f32.mrf.mxu0
    %v501 = vadd.f32 0.0, %v500
    %v502 = vpop.f32.mrf.mxu0
    %v503 = vpop.f32.mrf.mxu0
    %v504 = vadd.f32 0.0, %v503
    %v505 = vpop.f32.mrf.mxu0
    %506 = vmatprep.mubr.bf16.mxu0 0
    %507 = vmatmul.mubr.bf16.gmra.mxu0 %v231
    %v508 = vpop.f32.mrf.mxu0
    %v509 = vadd.f32 0.0, %v508
    %v510 = vpop.f32.mrf.mxu0
    %v511 = vpop.f32.mrf.mxu0
    %v512 = vadd.f32 0.0, %v511
    %v513 = vpop.f32.mrf.mxu0
    %514 = vmatprep.mubr.bf16.mxu0 0
    %515 = vmatmul.mubr.bf16.gmra.mxu0 %v232
    %v516 = vpop.f32.mrf.mxu0
    %v517 = vadd.f32 0.0, %v516
    %v518 = vpop.f32.mrf.mxu0
    %v519 = vpop.f32.mrf.mxu0
    %v520 = vadd.f32 0.0, %v519
    %v521 = vpop.f32.mrf.mxu0
    %522 = vdwg.mxu0
    %v539 = vunpack.c.l.b16 %v346
    %v540 = vunpack.c.l.b16 %v347
    %v541 = vunpack.c.l.b16 %v348
    %v542 = vunpack.c.l.b16 %v349
    %v543 = vunpack.c.l.b16 %v350
    %v544 = vunpack.c.l.b16 %v351
    %v545 = vunpack.c.l.b16 %v352
    %v546 = vunpack.c.l.b16 %v353
    %v547 = vunpack.c.l.b16 %v354
    %v548 = vunpack.c.l.b16 %v355
    %v549 = vunpack.c.l.b16 %v356
    %v550 = vunpack.c.l.b16 %v357
    %v551 = vunpack.c.l.b16 %v358
    %v552 = vunpack.c.l.b16 %v359
    %v553 = vunpack.c.l.b16 %v360
    %v554 = vunpack.c.l.b16 %v361
    %v555 = vpack.c.b16 %v540, %v539
    %v556 = vpack.c.b16 %v542, %v541
    %v557 = vpack.c.b16 %v544, %v543
    %v558 = vpack.c.b16 %v546, %v545
    %v559 = vpack.c.b16 %v548, %v547
    %v560 = vpack.c.b16 %v550, %v549
    %v561 = vpack.c.b16 %v552, %v551
    %v562 = vpack.c.b16 %v554, %v553
    %571 = vmatprep.subr.bf16.mxu0 0
    %572 = vmatpush1.bf16.msra.mxu0 %v562
    %573 = vmatprep.subr.bf16.mxu0 0
    %574 = vmatpush1.bf16.msra.mxu0 %v561
    %575 = vmatprep.subr.bf16.mxu0 0
    %576 = vmatpush1.bf16.msra.mxu0 %v560
    %577 = vmatprep.subr.bf16.mxu0 0
    %578 = vmatpush1.bf16.msra.mxu0 %v559
    %579 = vmatprep.subr.bf16.mxu0 0
    %580 = vmatpush1.bf16.msra.mxu0 %v558
    %581 = vmatprep.subr.bf16.mxu0 0
    %582 = vmatpush1.bf16.msra.mxu0 %v557
    %583 = vmatprep.subr.bf16.mxu0 0
    %584 = vmatpush1.bf16.msra.mxu0 %v556
    %585 = vmatprep.subr.bf16.mxu0 0
    %586 = vmatpush1.bf16.msra.mxu0 %v555
    %587 = vmatprep.subr.bf16.mxu0 0
    %588 = vmatpush2.bf16.msra.mxu0 0
    %589 = vmatprep.subr.bf16.mxu0 0
    %590 = vmatpush2.bf16.msra.mxu0 0
    %591 = vmatprep.subr.bf16.mxu0 0
    %592 = vmatpush2.bf16.msra.mxu0 0
    %593 = vmatprep.subr.bf16.mxu0 0
    %594 = vmatpush2.bf16.msra.mxu0 0
    %595 = vmatprep.subr.bf16.mxu0 0
    %596 = vmatpush2.bf16.msra.mxu0 0
    %597 = vmatprep.subr.bf16.mxu0 0
    %598 = vmatpush2.bf16.msra.mxu0 0
    %599 = vmatprep.subr.bf16.mxu0 0
    %600 = vmatpush2.bf16.msra.mxu0 0
    %601 = vmatprep.subr.bf16.mxu0 0
    %602 = vmatpush2.bf16.msra.mxu0 0
    %603 = vmatprep.mubr.bf16.mxu0 0
    %604 = vmatmul.mubr.bf16.gmra.mxu0 %v338
    %v605 = vpop.f32.mrf.mxu0
    %v606 = vadd.f32 %v461, %v605
    %v607 = vpop.f32.mrf.mxu0
    %v608 = vpop.f32.mrf.mxu0
    %v609 = vadd.f32 %v464, %v608
    %v610 = vpop.f32.mrf.mxu0
    %611 = vmatprep.mubr.bf16.mxu0 0
    %612 = vmatmul.mubr.bf16.gmra.mxu0 %v339
    %v613 = vpop.f32.mrf.mxu0
    %v614 = vadd.f32 %v469, %v613
    %v615 = vpop.f32.mrf.mxu0
    %v616 = vpop.f32.mrf.mxu0
    %v617 = vadd.f32 %v472, %v616
    %v618 = vpop.f32.mrf.mxu0
    %619 = vmatprep.mubr.bf16.mxu0 0
    %620 = vmatmul.mubr.bf16.gmra.mxu0 %v340
    %v621 = vpop.f32.mrf.mxu0
    %v622 = vadd.f32 %v477, %v621
    %v623 = vpop.f32.mrf.mxu0
    %v624 = vpop.f32.mrf.mxu0
    %v625 = vadd.f32 %v480, %v624
    %v626 = vpop.f32.mrf.mxu0
    %627 = vmatprep.mubr.bf16.mxu0 0
    %628 = vmatmul.mubr.bf16.gmra.mxu0 %v341
    %v629 = vpop.f32.mrf.mxu0
    %v630 = vadd.f32 %v485, %v629
    %v631 = vpop.f32.mrf.mxu0
    %v632 = vpop.f32.mrf.mxu0
    %v633 = vadd.f32 %v488, %v632
    %v634 = vpop.f32.mrf.mxu0
    %635 = vmatprep.mubr.bf16.mxu0 0
    %636 = vmatmul.mubr.bf16.gmra.mxu0 %v342
    %v637 = vpop.f32.mrf.mxu0
    %v638 = vadd.f32 %v493, %v637
    %v639 = vpop.f32.mrf.mxu0
    %v640 = vpop.f32.mrf.mxu0
    %v641 = vadd.f32 %v496, %v640
    %v642 = vpop.f32.mrf.mxu0
    %643 = vmatprep.mubr.bf16.mxu0 0
    %644 = vmatmul.mubr.bf16.gmra.mxu0 %v343
    %v645 = vpop.f32.mrf.mxu0
    %v646 = vadd.f32 %v501, %v645
    %v647 = vpop.f32.mrf.mxu0
    %v648 = vpop.f32.mrf.mxu0
    %v649 = vadd.f32 %v504, %v648
    %v650 = vpop.f32.mrf.mxu0
    %651 = vmatprep.mubr.bf16.mxu0 0
    %652 = vmatmul.mubr.bf16.gmra.mxu0 %v344
    %v653 = vpop.f32.mrf.mxu0
    %v654 = vadd.f32 %v509, %v653
    %v655 = vpop.f32.mrf.mxu0
    %v656 = vpop.f32.mrf.mxu0
    %v657 = vadd.f32 %v512, %v656
    %v658 = vpop.f32.mrf.mxu0
    %659 = vmatprep.mubr.bf16.mxu0 0
    %660 = vmatmul.mubr.bf16.gmra.mxu0 %v345
    %v661 = vpop.f32.mrf.mxu0
    %v662 = vadd.f32 %v517, %v661
    %v663 = vpop.f32.mrf.mxu0
    %v664 = vpop.f32.mrf.mxu0
    %v665 = vadd.f32 %v520, %v664
    %v666 = vpop.f32.mrf.mxu0
    %667 = vdwg.mxu0
    %v668 = vld [vmem:[%s4] sm:$0x1]
    %v670 = vlaneseq
    %v671 = vshrl.u32 %v670, 7
    %v672 = vsub.s32 0, %v671
    %v673 = vrot.slane %v668, %v672
    %v675 = vadd.f32 %v606, %v673
    %v676 = vadd.f32 %v609, %v673
    %v677 = vadd.f32 %v614, %v673
    %v678 = vadd.f32 %v617, %v673
    %v679 = vadd.f32 %v622, %v673
    %v680 = vadd.f32 %v625, %v673
    %v681 = vadd.f32 %v630, %v673
    %v682 = vadd.f32 %v633, %v673
    %v683 = vadd.f32 %v638, %v673
    %v684 = vadd.f32 %v641, %v673
    %v685 = vadd.f32 %v646, %v673
    %v686 = vadd.f32 %v649, %v673
    %v687 = vadd.f32 %v654, %v673
    %v688 = vadd.f32 %v657, %v673
    %v689 = vadd.f32 %v662, %v673
    %v690 = vadd.f32 %v665, %v673
    %v691 = vmax.f32 %v675, 0.0
    %v692 = vmax.f32 %v676, 0.0
    %v693 = vmax.f32 %v677, 0.0
    %v694 = vmax.f32 %v678, 0.0
    %v695 = vmax.f32 %v679, 0.0
    %v696 = vmax.f32 %v680, 0.0
    %v697 = vmax.f32 %v681, 0.0
    %v698 = vmax.f32 %v682, 0.0
    %v699 = vmax.f32 %v683, 0.0
    %v700 = vmax.f32 %v684, 0.0
    %v701 = vmax.f32 %v685, 0.0
    %v702 = vmax.f32 %v686, 0.0
    %v703 = vmax.f32 %v687, 0.0
    %v704 = vmax.f32 %v688, 0.0
    %v705 = vmax.f32 %v689, 0.0
    %v706 = vmax.f32 %v690, 0.0
    %v707 = vpack.c.bf16 %v692, %v691
    %v708 = vpack.c.bf16 %v694, %v693
    %v709 = vpack.c.bf16 %v696, %v695
    %v710 = vpack.c.bf16 %v698, %v697
    %v711 = vpack.c.bf16 %v700, %v699
    %v712 = vpack.c.bf16 %v702, %v701
    %v713 = vpack.c.bf16 %v704, %v703
    %v714 = vpack.c.bf16 %v706, %v705
    %v715 = vld [vmem:[#allocation10] sm:$0xf]
    %v716 = vld [vmem:[#allocation10 + $0x4] sm:$0xf]
    %v717 = vld [vmem:[#allocation10 + $0x8] sm:$0xf]
    %v718 = vld [vmem:[#allocation10 + $0xc] sm:$0xf]
    %v719 = vld [vmem:[#allocation10 + $0x10] sm:$0xf]
    %v720 = vld [vmem:[#allocation10 + $0x14] sm:$0xf]
    %v721 = vld [vmem:[#allocation10 + $0x18] sm:$0xf]
    %v722 = vld [vmem:[#allocation10 + $0x1c] sm:$0xf]
    %v723 = vld [vmem:[#allocation10 + $0x20] sm:$0xf]
    %v724 = vld [vmem:[#allocation10 + $0x24] sm:$0xf]
    %v725 = vld [vmem:[#allocation10 + $0x28] sm:$0xf]
    %v726 = vld [vmem:[#allocation10 + $0x2c] sm:$0xf]
    %v727 = vld [vmem:[#allocation10 + $0x30] sm:$0xf]
    %v728 = vld [vmem:[#allocation10 + $0x34] sm:$0xf]
    %v729 = vld [vmem:[#allocation10 + $0x38] sm:$0xf]
    %v730 = vld [vmem:[#allocation10 + $0x3c] sm:$0xf]
    %v747 = vunpack.c.l.b16 %v715
    %v748 = vunpack.c.l.b16 %v716
    %v749 = vunpack.c.l.b16 %v717
    %v750 = vunpack.c.l.b16 %v718
    %v751 = vunpack.c.l.b16 %v719
    %v752 = vunpack.c.l.b16 %v720
    %v753 = vunpack.c.l.b16 %v721
    %v754 = vunpack.c.l.b16 %v722
    %v755 = vunpack.c.l.b16 %v723
    %v756 = vunpack.c.l.b16 %v724
    %v757 = vunpack.c.l.b16 %v725
    %v758 = vunpack.c.l.b16 %v726
    %v759 = vunpack.c.l.b16 %v727
    %v760 = vunpack.c.l.b16 %v728
    %v761 = vunpack.c.l.b16 %v729
    %v762 = vunpack.c.l.b16 %v730
    %v763 = vpack.c.b16 %v748, %v747
    %v764 = vpack.c.b16 %v750, %v749
    %v765 = vpack.c.b16 %v752, %v751
    %v766 = vpack.c.b16 %v754, %v753
    %v767 = vpack.c.b16 %v756, %v755
    %v768 = vpack.c.b16 %v758, %v757
    %v769 = vpack.c.b16 %v760, %v759
    %v770 = vpack.c.b16 %v762, %v761
    %779 = vmatprep.subr.bf16.mxu0 0
    %780 = vmatpush1.bf16.msra.mxu0 %v770
    %781 = vmatprep.subr.bf16.mxu0 0
    %782 = vmatpush1.bf16.msra.mxu0 %v769
    %783 = vmatprep.subr.bf16.mxu0 0
    %784 = vmatpush1.bf16.msra.mxu0 %v768
    %785 = vmatprep.subr.bf16.mxu0 0
    %786 = vmatpush1.bf16.msra.mxu0 %v767
    %787 = vmatprep.subr.bf16.mxu0 0
    %788 = vmatpush1.bf16.msra.mxu0 %v766
    %789 = vmatprep.subr.bf16.mxu0 0
    %790 = vmatpush1.bf16.msra.mxu0 %v765
    %791 = vmatprep.subr.bf16.mxu0 0
    %792 = vmatpush1.bf16.msra.mxu0 %v764
    %793 = vmatprep.subr.bf16.mxu0 0
    %794 = vmatpush1.bf16.msra.mxu0 %v763
    %795 = vmatprep.subr.bf16.mxu0 0
    %796 = vmatpush2.bf16.msra.mxu0 0
    %797 = vmatprep.subr.bf16.mxu0 0
    %798 = vmatpush2.bf16.msra.mxu0 0
    %799 = vmatprep.subr.bf16.mxu0 0
    %800 = vmatpush2.bf16.msra.mxu0 0
    %801 = vmatprep.subr.bf16.mxu0 0
    %802 = vmatpush2.bf16.msra.mxu0 0
    %803 = vmatprep.subr.bf16.mxu0 0
    %804 = vmatpush2.bf16.msra.mxu0 0
    %805 = vmatprep.subr.bf16.mxu0 0
    %806 = vmatpush2.bf16.msra.mxu0 0
    %807 = vmatprep.subr.bf16.mxu0 0
    %808 = vmatpush2.bf16.msra.mxu0 0
    %809 = vmatprep.subr.bf16.mxu0 0
    %810 = vmatpush2.bf16.msra.mxu0 0
    %811 = vmatprep.mubr.bf16.mxu0 0
    %812 = vmatmul.mubr.bf16.gmra.mxu0 %v707
    %v813 = vpop.f32.mrf.mxu0
    %v814 = vadd.f32 0.0, %v813
    %v815 = vpop.f32.mrf.mxu0
    %v816 = vpop.f32.mrf.mxu0
    %v817 = vadd.f32 0.0, %v816
    %v818 = vpop.f32.mrf.mxu0
    %819 = vmatprep.mubr.bf16.mxu0 0
    %820 = vmatmul.mubr.bf16.gmra.mxu0 %v708
    %v821 = vpop.f32.mrf.mxu0
    %v822 = vadd.f32 0.0, %v821
    %v823 = vpop.f32.mrf.mxu0
    %v824 = vpop.f32.mrf.mxu0
    %v825 = vadd.f32 0.0, %v824
    %v826 = vpop.f32.mrf.mxu0
    %827 = vmatprep.mubr.bf16.mxu0 0
    %828 = vmatmul.mubr.bf16.gmra.mxu0 %v709
    %v829 = vpop.f32.mrf.mxu0
    %v830 = vadd.f32 0.0, %v829
    %v831 = vpop.f32.mrf.mxu0
    %v832 = vpop.f32.mrf.mxu0
    %v833 = vadd.f32 0.0, %v832
    %v834 = vpop.f32.mrf.mxu0
    %835 = vmatprep.mubr.bf16.mxu0 0
    %836 = vmatmul.mubr.bf16.gmra.mxu0 %v710
    %v837 = vpop.f32.mrf.mxu0
    %v838 = vadd.f32 0.0, %v837
    %v839 = vpop.f32.mrf.mxu0
    %v840 = vpop.f32.mrf.mxu0
    %v841 = vadd.f32 0.0, %v840
    %v842 = vpop.f32.mrf.mxu0
    %843 = vmatprep.mubr.bf16.mxu0 0
    %844 = vmatmul.mubr.bf16.gmra.mxu0 %v711
    %v845 = vpop.f32.mrf.mxu0
    %v846 = vadd.f32 0.0, %v845
    %v847 = vpop.f32.mrf.mxu0
    %v848 = vpop.f32.mrf.mxu0
    %v849 = vadd.f32 0.0, %v848
    %v850 = vpop.f32.mrf.mxu0
    %851 = vmatprep.mubr.bf16.mxu0 0
    %852 = vmatmul.mubr.bf16.gmra.mxu0 %v712
    %v853 = vpop.f32.mrf.mxu0
    %v854 = vadd.f32 0.0, %v853
    %v855 = vpop.f32.mrf.mxu0
    %v856 = vpop.f32.mrf.mxu0
    %v857 = vadd.f32 0.0, %v856
    %v858 = vpop.f32.mrf.mxu0
    %859 = vmatprep.mubr.bf16.mxu0 0
    %860 = vmatmul.mubr.bf16.gmra.mxu0 %v713
    %v861 = vpop.f32.mrf.mxu0
    %v862 = vadd.f32 0.0, %v861
    %v863 = vpop.f32.mrf.mxu0
    %v864 = vpop.f32.mrf.mxu0
    %v865 = vadd.f32 0.0, %v864
    %v866 = vpop.f32.mrf.mxu0
    %867 = vmatprep.mubr.bf16.mxu0 0
    %868 = vmatmul.mubr.bf16.gmra.mxu0 %v714
    %v869 = vpop.f32.mrf.mxu0
    %v870 = vadd.f32 0.0, %v869
    %v871 = vpop.f32.mrf.mxu0
    %v872 = vpop.f32.mrf.mxu0
    %v873 = vadd.f32 0.0, %v872
    %v874 = vpop.f32.mrf.mxu0
    %875 = vdwg.mxu0
    %v876 = vpack.c.bf16 %v817, %v814
    %v877 = vpack.c.bf16 %v825, %v822
    %v878 = vpack.c.bf16 %v833, %v830
    %v879 = vpack.c.bf16 %v841, %v838
    %v880 = vpack.c.bf16 %v849, %v846
    %v881 = vpack.c.bf16 %v857, %v854
    %v882 = vpack.c.bf16 %v865, %v862
    %v883 = vpack.c.bf16 %v873, %v870
    %v884 = vld [vmem:[#allocation11] sm:$0xf]
    %v885 = vld [vmem:[#allocation11 + $0x4] sm:$0xf]
    %v886 = vld [vmem:[#allocation11 + $0x8] sm:$0xf]
    %v887 = vld [vmem:[#allocation11 + $0xc] sm:$0xf]
    %v888 = vld [vmem:[#allocation11 + $0x10] sm:$0xf]
    %v889 = vld [vmem:[#allocation11 + $0x14] sm:$0xf]
    %v890 = vld [vmem:[#allocation11 + $0x18] sm:$0xf]
    %v891 = vld [vmem:[#allocation11 + $0x1c] sm:$0xf]
    %v892 = vld [vmem:[#allocation11 + $0x20] sm:$0xf]
    %v893 = vld [vmem:[#allocation11 + $0x24] sm:$0xf]
    %v894 = vld [vmem:[#allocation11 + $0x28] sm:$0xf]
    %v895 = vld [vmem:[#allocation11 + $0x2c] sm:$0xf]
    %v896 = vld [vmem:[#allocation11 + $0x30] sm:$0xf]
    %v897 = vld [vmem:[#allocation11 + $0x34] sm:$0xf]
    %v898 = vld [vmem:[#allocation11 + $0x38] sm:$0xf]
    %v899 = vld [vmem:[#allocation11 + $0x3c] sm:$0xf]
    %v916 = vunpack.c.l.b16 %v884
    %v917 = vunpack.c.l.b16 %v885
    %v918 = vunpack.c.l.b16 %v886
    %v919 = vunpack.c.l.b16 %v887
    %v920 = vunpack.c.l.b16 %v888
    %v921 = vunpack.c.l.b16 %v889
    %v922 = vunpack.c.l.b16 %v890
    %v923 = vunpack.c.l.b16 %v891
    %v924 = vunpack.c.l.b16 %v892
    %v925 = vunpack.c.l.b16 %v893
    %v926 = vunpack.c.l.b16 %v894
    %v927 = vunpack.c.l.b16 %v895
    %v928 = vunpack.c.l.b16 %v896
    %v929 = vunpack.c.l.b16 %v897
    %v930 = vunpack.c.l.b16 %v898
    %v931 = vunpack.c.l.b16 %v899
    %v932 = vpack.c.b16 %v917, %v916
    %v933 = vpack.c.b16 %v919, %v918
    %v934 = vpack.c.b16 %v921, %v920
    %v935 = vpack.c.b16 %v923, %v922
    %v936 = vpack.c.b16 %v925, %v924
    %v937 = vpack.c.b16 %v927, %v926
    %v938 = vpack.c.b16 %v929, %v928
    %v939 = vpack.c.b16 %v931, %v930
    %948 = vmatprep.subr.bf16.mxu0 0
    %949 = vmatpush1.bf16.msra.mxu0 %v939
    %950 = vmatprep.subr.bf16.mxu0 0
    %951 = vmatpush1.bf16.msra.mxu0 %v938
    %952 = vmatprep.subr.bf16.mxu0 0
    %953 = vmatpush1.bf16.msra.mxu0 %v937
    %954 = vmatprep.subr.bf16.mxu0 0
    %955 = vmatpush1.bf16.msra.mxu0 %v936
    %956 = vmatprep.subr.bf16.mxu0 0
    %957 = vmatpush1.bf16.msra.mxu0 %v935
    %958 = vmatprep.subr.bf16.mxu0 0
    %959 = vmatpush1.bf16.msra.mxu0 %v934
    %960 = vmatprep.subr.bf16.mxu0 0
    %961 = vmatpush1.bf16.msra.mxu0 %v933
    %962 = vmatprep.subr.bf16.mxu0 0
    %963 = vmatpush1.bf16.msra.mxu0 %v932
    %964 = vmatprep.subr.bf16.mxu0 0
    %965 = vmatpush2.bf16.msra.mxu0 0
    %966 = vmatprep.subr.bf16.mxu0 0
    %967 = vmatpush2.bf16.msra.mxu0 0
    %968 = vmatprep.subr.bf16.mxu0 0
    %969 = vmatpush2.bf16.msra.mxu0 0
    %970 = vmatprep.subr.bf16.mxu0 0
    %971 = vmatpush2.bf16.msra.mxu0 0
    %972 = vmatprep.subr.bf16.mxu0 0
    %973 = vmatpush2.bf16.msra.mxu0 0
    %974 = vmatprep.subr.bf16.mxu0 0
    %975 = vmatpush2.bf16.msra.mxu0 0
    %976 = vmatprep.subr.bf16.mxu0 0
    %977 = vmatpush2.bf16.msra.mxu0 0
    %978 = vmatprep.subr.bf16.mxu0 0
    %979 = vmatpush2.bf16.msra.mxu0 0
    %980 = vmatprep.mubr.bf16.mxu0 0
    %981 = vmatmul.mubr.bf16.gmra.mxu0 %v707
    %v982 = vpop.f32.mrf.mxu0
    %v983 = vadd.f32 0.0, %v982
    %v984 = vpop.f32.mrf.mxu0
    %v985 = vpop.f32.mrf.mxu0
    %v986 = vadd.f32 0.0, %v985
    %v987 = vpop.f32.mrf.mxu0
    %988 = vmatprep.mubr.bf16.mxu0 0
    %989 = vmatmul.mubr.bf16.gmra.mxu0 %v708
    %v990 = vpop.f32.mrf.mxu0
    %v991 = vadd.f32 0.0, %v990
    %v992 = vpop.f32.mrf.mxu0
    %v993 = vpop.f32.mrf.mxu0
    %v994 = vadd.f32 0.0, %v993
    %v995 = vpop.f32.mrf.mxu0
    %996 = vmatprep.mubr.bf16.mxu0 0
    %997 = vmatmul.mubr.bf16.gmra.mxu0 %v709
    %v998 = vpop.f32.mrf.mxu0
    %v999 = vadd.f32 0.0, %v998
    %v1000 = vpop.f32.mrf.mxu0
    %v1001 = vpop.f32.mrf.mxu0
    %v1002 = vadd.f32 0.0, %v1001
    %v1003 = vpop.f32.mrf.mxu0
    %1004 = vmatprep.mubr.bf16.mxu0 0
    %1005 = vmatmul.mubr.bf16.gmra.mxu0 %v710
    %v1006 = vpop.f32.mrf.mxu0
    %v1007 = vadd.f32 0.0, %v1006
    %v1008 = vpop.f32.mrf.mxu0
    %v1009 = vpop.f32.mrf.mxu0
    %v1010 = vadd.f32 0.0, %v1009
    %v1011 = vpop.f32.mrf.mxu0
    %1012 = vmatprep.mubr.bf16.mxu0 0
    %1013 = vmatmul.mubr.bf16.gmra.mxu0 %v711
    %v1014 = vpop.f32.mrf.mxu0
    %v1015 = vadd.f32 0.0, %v1014
    %v1016 = vpop.f32.mrf.mxu0
    %v1017 = vpop.f32.mrf.mxu0
    %v1018 = vadd.f32 0.0, %v1017
    %v1019 = vpop.f32.mrf.mxu0
    %1020 = vmatprep.mubr.bf16.mxu0 0
    %1021 = vmatmul.mubr.bf16.gmra.mxu0 %v712
    %v1022 = vpop.f32.mrf.mxu0
    %v1023 = vadd.f32 0.0, %v1022
    %v1024 = vpop.f32.mrf.mxu0
    %v1025 = vpop.f32.mrf.mxu0
    %v1026 = vadd.f32 0.0, %v1025
    %v1027 = vpop.f32.mrf.mxu0
    %1028 = vmatprep.mubr.bf16.mxu0 0
    %1029 = vmatmul.mubr.bf16.gmra.mxu0 %v713
    %v1030 = vpop.f32.mrf.mxu0
    %v1031 = vadd.f32 0.0, %v1030
    %v1032 = vpop.f32.mrf.mxu0
    %v1033 = vpop.f32.mrf.mxu0
    %v1034 = vadd.f32 0.0, %v1033
    %v1035 = vpop.f32.mrf.mxu0
    %1036 = vmatprep.mubr.bf16.mxu0 0
    %1037 = vmatmul.mubr.bf16.gmra.mxu0 %v714
    %v1038 = vpop.f32.mrf.mxu0
    %v1039 = vadd.f32 0.0, %v1038
    %v1040 = vpop.f32.mrf.mxu0
    %v1041 = vpop.f32.mrf.mxu0
    %v1042 = vadd.f32 0.0, %v1041
    %v1043 = vpop.f32.mrf.mxu0
    %1044 = vdwg.mxu0
    %1045 = vmatprep.subr.bf16.mxu0 0
    %1046 = vmatpush1.bf16.msra.mxu0 %v883
    %1047 = vmatprep.subr.bf16.mxu0 0
    %1048 = vmatpush1.bf16.msra.mxu0 %v882
    %1049 = vmatprep.subr.bf16.mxu0 0
    %1050 = vmatpush1.bf16.msra.mxu0 %v881
    %1051 = vmatprep.subr.bf16.mxu0 0
    %1052 = vmatpush1.bf16.msra.mxu0 %v880
    %1053 = vmatprep.subr.bf16.mxu0 0
    %1054 = vmatpush1.bf16.msra.mxu0 %v879
    %1055 = vmatprep.subr.bf16.mxu0 0
    %1056 = vmatpush1.bf16.msra.mxu0 %v878
    %1057 = vmatprep.subr.bf16.mxu0 0
    %1058 = vmatpush1.bf16.msra.mxu0 %v877
    %1059 = vmatprep.subr.bf16.mxu0 0
    %1060 = vmatpush1.bf16.msra.mxu0 %v876
    %1061 = vmatprep.subr.bf16.mxu0 0
    %1062 = vmatpush2.bf16.msra.mxu0 0
    %1063 = vmatprep.subr.bf16.mxu0 0
    %1064 = vmatpush2.bf16.msra.mxu0 0
    %1065 = vmatprep.subr.bf16.mxu0 0
    %1066 = vmatpush2.bf16.msra.mxu0 0
    %1067 = vmatprep.subr.bf16.mxu0 0
    %1068 = vmatpush2.bf16.msra.mxu0 0
    %1069 = vmatprep.subr.bf16.mxu0 0
    %1070 = vmatpush2.bf16.msra.mxu0 0
    %1071 = vmatprep.subr.bf16.mxu0 0
    %1072 = vmatpush2.bf16.msra.mxu0 0
    %1073 = vmatprep.subr.bf16.mxu0 0
    %1074 = vmatpush2.bf16.msra.mxu0 0
    %1075 = vmatprep.subr.bf16.mxu0 0
    %1076 = vmatpush2.bf16.msra.mxu0 0
    %1077 = vmatprep.mubr.bf16.mxu0 0
    %1078 = vmatmul.mubr.bf16.gmra.mxu0 %v177
    %v1079 = vpop.f32.mrf.mxu0
    %v1080 = vadd.f32 %v983, %v1079
    %v1081 = vpop.f32.mrf.mxu0
    %v1082 = vpop.f32.mrf.mxu0
    %v1083 = vadd.f32 %v986, %v1082
    %v1084 = vpop.f32.mrf.mxu0
    %1085 = vmatprep.mubr.bf16.mxu0 0
    %1086 = vmatmul.mubr.bf16.gmra.mxu0 %v178
    %v1087 = vpop.f32.mrf.mxu0
    %v1088 = vadd.f32 %v991, %v1087
    %v1089 = vpop.f32.mrf.mxu0
    %v1090 = vpop.f32.mrf.mxu0
    %v1091 = vadd.f32 %v994, %v1090
    %v1092 = vpop.f32.mrf.mxu0
    %1093 = vmatprep.mubr.bf16.mxu0 0
    %1094 = vmatmul.mubr.bf16.gmra.mxu0 %v179
    %v1095 = vpop.f32.mrf.mxu0
    %v1096 = vadd.f32 %v999, %v1095
    %v1097 = vpop.f32.mrf.mxu0
    %v1098 = vpop.f32.mrf.mxu0
    %v1099 = vadd.f32 %v1002, %v1098
    %v1100 = vpop.f32.mrf.mxu0
    %1101 = vmatprep.mubr.bf16.mxu0 0
    %1102 = vmatmul.mubr.bf16.gmra.mxu0 %v180
    %v1103 = vpop.f32.mrf.mxu0
    %v1104 = vadd.f32 %v1007, %v1103
    %v1105 = vpop.f32.mrf.mxu0
    %v1106 = vpop.f32.mrf.mxu0
    %v1107 = vadd.f32 %v1010, %v1106
    %v1108 = vpop.f32.mrf.mxu0
    %1109 = vmatprep.mubr.bf16.mxu0 0
    %1110 = vmatmul.mubr.bf16.gmra.mxu0 %v181
    %v1111 = vpop.f32.mrf.mxu0
    %v1112 = vadd.f32 %v1015, %v1111
    %v1113 = vpop.f32.mrf.mxu0
    %v1114 = vpop.f32.mrf.mxu0
    %v1115 = vadd.f32 %v1018, %v1114
    %v1116 = vpop.f32.mrf.mxu0
    %1117 = vmatprep.mubr.bf16.mxu0 0
    %1118 = vmatmul.mubr.bf16.gmra.mxu0 %v182
    %v1119 = vpop.f32.mrf.mxu0
    %v1120 = vadd.f32 %v1023, %v1119
    %v1121 = vpop.f32.mrf.mxu0
    %v1122 = vpop.f32.mrf.mxu0
    %v1123 = vadd.f32 %v1026, %v1122
    %v1124 = vpop.f32.mrf.mxu0
    %1125 = vmatprep.mubr.bf16.mxu0 0
    %1126 = vmatmul.mubr.bf16.gmra.mxu0 %v183
    %v1127 = vpop.f32.mrf.mxu0
    %v1128 = vadd.f32 %v1031, %v1127
    %v1129 = vpop.f32.mrf.mxu0
    %v1130 = vpop.f32.mrf.mxu0
    %v1131 = vadd.f32 %v1034, %v1130
    %v1132 = vpop.f32.mrf.mxu0
    %1133 = vmatprep.mubr.bf16.mxu0 0
    %1134 = vmatmul.mubr.bf16.gmra.mxu0 %v184
    %v1135 = vpop.f32.mrf.mxu0
    %v1136 = vadd.f32 %v1039, %v1135
    %v1137 = vpop.f32.mrf.mxu0
    %v1138 = vpop.f32.mrf.mxu0
    %v1139 = vadd.f32 %v1042, %v1138
    %v1140 = vpop.f32.mrf.mxu0
    %1141 = vdwg.mxu0
    %v1142 = vld [vmem:[%s7] sm:$0x1]
    %v1144 = vlaneseq
    %v1145 = vshrl.u32 %v1144, 7
    %v1146 = vsub.s32 0, %v1145
    %v1147 = vrot.slane %v1142, %v1146
    %v1149 = vadd.f32 %v1080, %v1147
    %v1150 = vadd.f32 %v1083, %v1147
    %v1151 = vadd.f32 %v1088, %v1147
    %v1152 = vadd.f32 %v1091, %v1147
    %v1153 = vadd.f32 %v1096, %v1147
    %v1154 = vadd.f32 %v1099, %v1147
    %v1155 = vadd.f32 %v1104, %v1147
    %v1156 = vadd.f32 %v1107, %v1147
    %v1157 = vadd.f32 %v1112, %v1147
    %v1158 = vadd.f32 %v1115, %v1147
    %v1159 = vadd.f32 %v1120, %v1147
    %v1160 = vadd.f32 %v1123, %v1147
    %v1161 = vadd.f32 %v1128, %v1147
    %v1162 = vadd.f32 %v1131, %v1147
    %v1163 = vadd.f32 %v1136, %v1147
    %v1164 = vadd.f32 %v1139, %v1147
    %1165 = vst [vmem:[#allocation13] sm:$0xff] %v1149
    %1166 = vst [vmem:[#allocation13 + $0x8] sm:$0xff] %v1150
    %1167 = vst [vmem:[#allocation13 + $0x10] sm:$0xff] %v1151
    %1168 = vst [vmem:[#allocation13 + $0x18] sm:$0xff] %v1152
    %1169 = vst [vmem:[#allocation13 + $0x20] sm:$0xff] %v1153
    %1170 = vst [vmem:[#allocation13 + $0x28] sm:$0xff] %v1154
    %1171 = vst [vmem:[#allocation13 + $0x30] sm:$0xff] %v1155
    %1172 = vst [vmem:[#allocation13 + $0x38] sm:$0xff] %v1156
    %1173 = vst [vmem:[#allocation13 + $0x40] sm:$0xff] %v1157
    %1174 = vst [vmem:[#allocation13 + $0x48] sm:$0xff] %v1158
    %1175 = vst [vmem:[#allocation13 + $0x50] sm:$0xff] %v1159
    %1176 = vst [vmem:[#allocation13 + $0x58] sm:$0xff] %v1160
    %1177 = vst [vmem:[#allocation13 + $0x60] sm:$0xff] %v1161
    %1178 = vst [vmem:[#allocation13 + $0x68] sm:$0xff] %v1162
    %1179 = vst [vmem:[#allocation13 + $0x70] sm:$0xff] %v1163
    %1180 = vst [vmem:[#allocation13 + $0x78] sm:$0xff] %v1164
    // Predicated region
    $region58: #{tpu_custom_call.1} parent=1 // pred_check
      _
    $region59: #{tpu_custom_call.1} parent=1 // pred_check_branch
      %1182 = sbr.rel (0) target = $region61
    $region60: #{tpu_custom_call.1} parent=1 // pred_region
      %s1184 = ssub.s32 2048, 2048
      %1185 = vsyncadd [#allocation4], %s1184
      %s1186 = sshll.u32 [#allocation13], 4
      %s1187 = int_to_ptr.vmem [resolvable:$true] %s1186
      %1192 = dma.vmem_to_hbm [thread:$0]  %s1187, 2048, %s8, [#allocation4], 128, 128, 8
    $region61: #{tpu_custom_call.1} parent=1 // pred_fallthru
      _
    // Predicated region
    $region62: #{tpu_custom_call.1} parent=1 // pred_check
      _
    $region63: #{tpu_custom_call.1} parent=1 // pred_check_branch
      %1194 = sbr.rel (0) target = $region65
    $region64: #{tpu_custom_call.1} parent=1 // pred_region
      %1195 = dma.done [#allocation4], 2048
    $region65: #{tpu_custom_call.1} parent=1 // pred_fallthru
      _
    %1196 = vsyncpa [#allocation3], 1
    %1197 = vsyncpa [#allocation6], 1
    %1198 = vsyncpa [#allocation9], 1
    %1199 = vsyncpa [#allocation12], 1
    %1200 = vsyncpa [#allocation4], 1

</llo_original>
